<compile_context>
chip_gen: v5e
topology: v5e:2x2
jax: 0.10.0
libtpu: 0.0.40
codegen_flags: <defaults>
</compile_context>

<pallas_src>
import math

import jax
import jax.numpy as jnp
from jax import lax
from jax.experimental import pallas as pl
from jax.experimental.pallas import tpu as pltpu

HIDDEN = 64          # module default hidden=64
INNER = 16           # fixed inner width of each MLP (fc1 out / fc2 in)
NUM_MLPS = 8

_INV_SQRT2 = 1.0 / math.sqrt(2.0)


def _gelu_exact(t):
    # nn.GELU() default: exact erf-based GELU, computed in f32.
    return 0.5 * t * (1.0 + lax.erf(t * _INV_SQRT2))


def _chain_kernel(x_ref, w1_ref, mt_ref, w2_ref, o_ref):
    """x:[Bt,H]  w1p:[16,H]  mt:[7,16,16]  w2:[16,H]  o:[Bt,H].

    The running intermediate is uT = [16, Bt] (batch mapped to the 128-lane
    axis) so the GELU/erf polynomial runs lane-dense.  All scalar ops and the
    fc2_i @ fc1_{i+1} products are pre-folded into the weights by the wrapper.
    """
    mm_dtype = w1_ref.dtype
    x = x_ref[...].astype(mm_dtype)                                   # [Bt, H]
    # uT[n, b] = sum_h w1p[n, h] * x[b, h]   (rhs contracts its last dim)
    uT = lax.dot_general(w1_ref[...], x, (((1,), (1,)), ((), ())),
                         preferred_element_type=jnp.float32)          # [16, Bt]
    for i in range(NUM_MLPS - 1):                    # 7 fused 16x16 hops
        vT = _gelu_exact(uT).astype(mm_dtype)
        uT = lax.dot_general(mt_ref[i], vT, (((1,), (0,)), ((), ())),
                             preferred_element_type=jnp.float32)      # [16, Bt]
    vT = _gelu_exact(uT).astype(mm_dtype)
    # out[b, h] = sum_k vT[k, b] * w2[k, h]
    out = lax.dot_general(vT, w2_ref[...], (((0,), (0,)), ((), ())),
                          preferred_element_type=jnp.float32)         # [Bt, H]
    o_ref[...] = out.astype(o_ref.dtype)


def make_params(hidden=HIDDEN, dtype=jnp.float32):
    """Deterministic weights, exactly as the PyTorch __init__ fills them.

    Returns transposed module weights:
      w1t[i] = mlp_{i+1}.fc1.weight.T : [hidden, 16], filled with value
      w2t[i] = mlp_{i+1}.fc2.weight.T : [16, hidden], filled with value * 2
    """
    w1t, w2t = [], []
    for idx in range(NUM_MLPS):
        value = float(idx)  # mlp1 -> 0, mlp2 -> 1, ..., mlp8 -> 7
        w1t.append(jnp.full((hidden, INNER), value, dtype=dtype))
        w2t.append(jnp.full((INNER, hidden), value * 2.0, dtype=dtype))
    return jnp.stack(w1t, axis=0), jnp.stack(w2t, axis=0)


def _prepare_weights(w1t, w2t, compute_dtype):
    """Fold scalar ops and the cross-MLP fc2@fc1 products into the weights."""
    hp = lax.Precision.HIGHEST
    w1s = w1t.astype(jnp.float32)
    w2s = w2t.astype(jnp.float32)
    # Exact scalar folds (bias-free linears):
    w1s = w1s.at[0].multiply(2.0)   # x = x + x            -> fc1 of mlp1
    w2s = w2s.at[0].multiply(2.0)   # x = x * 2 after mlp1 -> fc2 of mlp1
    w2s = w2s.at[1].multiply(8.0)   # x = x*2*2*2 (mlp2)   -> fc2 of mlp2
    # Cross-MLP fold: M_{i+1} = w2t[i] @ w1t[i+1]  (16x16), stored transposed
    # so the in-kernel hop is a standard [16,16] x [16,Bt] matmul.
    mt = jnp.einsum('ikh,ihn->ink', w2s[:-1], w1s[1:], precision=hp)  # [7,16,16]
    w1p = jnp.swapaxes(w1s[0], 0, 1)                                  # [16, H]
    w2_last = w2s[-1]                                                 # [16, H]
    return (w1p.astype(compute_dtype), mt.astype(compute_dtype),
            w2_last.astype(compute_dtype))


def eight_mlp_with_ops(x, w1t, w2t, *, block_b=1024, compute_dtype=jnp.float32):
    """Forward pass of EightMLPWithOps.

    x    : [B, hidden]
    w1t  : [8, hidden, 16]   (fc1.weight.T per MLP, *unscaled* module weights)
    w2t  : [8, 16, hidden]   (fc2.weight.T per MLP, *unscaled* module weights)
    compute_dtype: jnp.float32 (default, matches PyTorch) or jnp.bfloat16
                   (MXU-native on v6e/v7x; f32 accumulation is kept).
    """
    b, h = x.shape
    w1p, mt, w2_last = _prepare_weights(w1t, w2t, compute_dtype)

    if b <= block_b:
        # Small batch: whole operands (<~0.5 MiB) live in VMEM; no grid, no
        # pipeline prologue/epilogue or per-step bookkeeping.
        return pl.pallas_call(
            _chain_kernel,
            out_shape=jax.ShapeDtypeStruct((b, h), x.dtype),
            in_specs=[
                pl.BlockSpec(memory_space=pltpu.MemorySpace.VMEM),
                pl.BlockSpec(memory_space=pltpu.MemorySpace.VMEM),
                pl.BlockSpec(memory_space=pltpu.MemorySpace.VMEM),
                pl.BlockSpec(memory_space=pltpu.MemorySpace.VMEM),
            ],
            out_specs=pl.BlockSpec(memory_space=pltpu.MemorySpace.VMEM),
        )(x, w1p, mt, w2_last)

    # Large batch: pad B up to a multiple of block_b (padded rows are zeros and
    # are sliced off), tile the batch axis and mark it "parallel".  Weights use
    # a constant index_map so they stay VMEM-resident across the grid.
    # NOTE: on v7x, pltpu.CORE_PARALLEL / pl.core_map would guarantee the
    # 2-TensorCore split; "parallel" is kept here for portability to v5e/v6e.
    nb = pl.cdiv(b, block_b)
    b_pad = nb * block_b
    xp = x if b_pad == b else jnp.pad(x, ((0, b_pad - b), (0, 0)))
    out = pl.pallas_call(
        _chain_kernel,
        out_shape=jax.ShapeDtypeStruct((b_pad, h), x.dtype),
        grid=(nb,),
        in_specs=[
            pl.BlockSpec((block_b, h), lambda i: (i, 0)),
            pl.BlockSpec((INNER, h), lambda i: (0, 0)),
            pl.BlockSpec((NUM_MLPS - 1, INNER, INNER), lambda i: (0, 0, 0)),
            pl.BlockSpec((INNER, h), lambda i: (0, 0)),
        ],
        out_specs=pl.BlockSpec((block_b, h), lambda i: (i, 0)),
        compiler_params=pltpu.CompilerParams(
            dimension_semantics=("parallel",)),
    )(xp, w1p, mt, w2_last)
    return out if b_pad == b else out[:b]


def _reference(x, w1t, w2t):
    """Pure-JAX reference mirroring the PyTorch forward exactly
    (unfolded weights + explicit elementwise ops, highest matmul precision)."""
    hp = lax.Precision.HIGHEST
    x = x.astype(jnp.float32)
    x = x + x

    def mlp(v, i):
        t = jnp.dot(v, w1t[i], precision=hp)
        t = 0.5 * t * (1.0 + lax.erf(t * _INV_SQRT2))
        return jnp.dot(t, w2t[i], precision=hp)

    x = mlp(x, 0)
    x = x * 2.0
    x = mlp(x, 1)
    x = x * 2.0
    x = x * 2.0
    x = x * 2.0
    for i in range(2, NUM_MLPS):
        x = mlp(x, i)
    return x


def _norm_err(out, ref):
    scale = jnp.maximum(1.0, jnp.max(jnp.abs(ref)))
    return float(jnp.max(jnp.abs(out.astype(jnp.float32) - ref)) / scale)


if __name__ == "__main__":
    key = jax.random.PRNGKey(0)
    kx, kxb, kw1, kw2 = jax.random.split(key, 4)

    batch = 8
    x = jax.random.normal(kx, (batch, HIDDEN), dtype=jnp.float32)

    # (a) Exact module weights (weight.fill_(value) / fill_(value*2)).
    #     mlp1's weights are all zero, so the true output is identically zero.
    w1t, w2t = make_params(HIDDEN, jnp.float32)
    out = jax.block_until_ready(eight_mlp_with_ops(x, w1t, w2t))
    ref = _reference(x, w1t, w2t)
    assert out.shape == (batch, HIDDEN)
    assert jnp.allclose(out, ref, atol=1e-6), "module-weight mismatch"

    # (b) Random weights: non-degenerate numeric check of the folded
    #     matmul/GELU chain (small-batch, gridless path).
    w1r = jax.random.normal(kw1, (NUM_MLPS, HIDDEN, INNER), jnp.float32) * 0.125
    w2r = jax.random.normal(kw2, (NUM_MLPS, INNER, HIDDEN), jnp.float32) * 0.4
    out_r = jax.block_until_ready(eight_mlp_with_ops(x, w1r, w2r))
    ref_r = _reference(x, w1r, w2r)
    assert float(jnp.max(jnp.abs(ref_r))) > 1e-2, "degenerate random test"
    assert _norm_err(out_r, ref_r) < 1e-2, "random-weight mismatch (small batch)"

    # (c) Large batch NOT divisible by block_b: exercises the padded,
    #     batch-tiled "parallel" grid path.
    big_batch = 2500
    xb = jax.random.normal(kxb, (big_batch, HIDDEN), dtype=jnp.float32)
    out_b = jax.block_until_ready(eight_mlp_with_ops(xb, w1r, w2r, block_b=1024))
    ref_b = _reference(xb, w1r, w2r)
    assert out_b.shape == (big_batch, HIDDEN)
    assert _norm_err(out_b, ref_b) < 1e-2, "tiled-path mismatch"

    # (d) bf16 operands with f32 accumulation (MXU-native path on v6e/v7x);
    #     looser tolerance since the module specifies fp32 + exact-erf GELU.
    out_bf = jax.block_until_ready(
        eight_mlp_with_ops(xb, w1r, w2r, block_b=1024,
                           compute_dtype=jnp.bfloat16))
    assert out_bf.shape == (big_batch, HIDDEN)
    assert _norm_err(out_bf, ref_b) < 1e-1, "bf16-path mismatch"

    print("KERNEL_OK")
</pallas_src>

<mosaic_0001>
module attributes {stable_mosaic.version = 11 : i64} {
  func.func @_chain_kernel(%arg0: memref<8x64xf32, #tpu.memory_space<vmem>>, %arg1: memref<16x64xf32, #tpu.memory_space<vmem>>, %arg2: memref<7x16x16xf32, #tpu.memory_space<vmem>>, %arg3: memref<16x64xf32, #tpu.memory_space<vmem>>, %arg4: memref<8x64xf32, #tpu.memory_space<vmem>>) attributes {dimension_semantics = [], scalar_prefetch = 0 : i64, scratch_operands = 0 : i64, tpu.core_type = #tpu.core_type<tc>} {
    %c0 = arith.constant 0 : index
    %c0_0 = arith.constant 0 : index
    %0 = vector.load %arg0[%c0, %c0_0] : memref<8x64xf32, #tpu.memory_space<vmem>>, vector<8x64xf32>
    %c0_1 = arith.constant 0 : index
    %c0_2 = arith.constant 0 : index
    %1 = vector.load %arg1[%c0_1, %c0_2] : memref<16x64xf32, #tpu.memory_space<vmem>>, vector<16x64xf32>
    %cst = arith.constant dense<0.000000e+00> : vector<16x8xf32>
    %2 = tpu.matmul %1, %0, %cst {dimension_numbers = #tpu.dot_dimension_numbers<[1], [1], [0], [0], [0, 0, 1, 0], [], []>} : vector<16x64xf32>, vector<8x64xf32>, vector<16x8xf32> -> vector<16x8xf32>
    %cst_3 = arith.constant 5.000000e-01 : f32
    %3 = vector.broadcast %cst_3 : f32 to vector<16x8xf32>
    %4 = arith.mulf %3, %2 : vector<16x8xf32>
    %cst_4 = arith.constant 0.707106769 : f32
    %5 = vector.broadcast %cst_4 : f32 to vector<16x8xf32>
    %6 = arith.mulf %2, %5 : vector<16x8xf32>
    %7 = math.erf %6 : vector<16x8xf32>
    %cst_5 = arith.constant 1.000000e+00 : f32
    %8 = vector.broadcast %cst_5 : f32 to vector<16x8xf32>
    %9 = arith.addf %8, %7 : vector<16x8xf32>
    %10 = arith.mulf %4, %9 : vector<16x8xf32>
    %c0_6 = arith.constant 0 : index
    %c0_7 = arith.constant 0 : index
    %c0_8 = arith.constant 0 : index
    %11 = vector.load %arg2[%c0_6, %c0_7, %c0_8] : memref<7x16x16xf32, #tpu.memory_space<vmem>>, vector<1x16x16xf32>
    %12 = vector.shape_cast %11 : vector<1x16x16xf32> to vector<16x16xf32>
    %cst_9 = arith.constant dense<0.000000e+00> : vector<16x8xf32>
    %13 = tpu.matmul %12, %10, %cst_9 {dimension_numbers = #tpu.dot_dimension_numbers<[1], [0], [0], [1], [0, 0, 1, 1], [], []>} : vector<16x16xf32>, vector<16x8xf32>, vector<16x8xf32> -> vector<16x8xf32>
    %cst_10 = arith.constant 5.000000e-01 : f32
    %14 = vector.broadcast %cst_10 : f32 to vector<16x8xf32>
    %15 = arith.mulf %14, %13 : vector<16x8xf32>
    %cst_11 = arith.constant 0.707106769 : f32
    %16 = vector.broadcast %cst_11 : f32 to vector<16x8xf32>
    %17 = arith.mulf %13, %16 : vector<16x8xf32>
    %18 = math.erf %17 : vector<16x8xf32>
    %cst_12 = arith.constant 1.000000e+00 : f32
    %19 = vector.broadcast %cst_12 : f32 to vector<16x8xf32>
    %20 = arith.addf %19, %18 : vector<16x8xf32>
    %21 = arith.mulf %15, %20 : vector<16x8xf32>
    %c1 = arith.constant 1 : index
    %c0_13 = arith.constant 0 : index
    %c0_14 = arith.constant 0 : index
    %22 = vector.load %arg2[%c1, %c0_13, %c0_14] : memref<7x16x16xf32, #tpu.memory_space<vmem>>, vector<1x16x16xf32>
    %23 = vector.shape_cast %22 : vector<1x16x16xf32> to vector<16x16xf32>
    %cst_15 = arith.constant dense<0.000000e+00> : vector<16x8xf32>
    %24 = tpu.matmul %23, %21, %cst_15 {dimension_numbers = #tpu.dot_dimension_numbers<[1], [0], [0], [1], [0, 0, 1, 1], [], []>} : vector<16x16xf32>, vector<16x8xf32>, vector<16x8xf32> -> vector<16x8xf32>
    %cst_16 = arith.constant 5.000000e-01 : f32
    %25 = vector.broadcast %cst_16 : f32 to vector<16x8xf32>
    %26 = arith.mulf %25, %24 : vector<16x8xf32>
    %cst_17 = arith.constant 0.707106769 : f32
    %27 = vector.broadcast %cst_17 : f32 to vector<16x8xf32>
    %28 = arith.mulf %24, %27 : vector<16x8xf32>
    %29 = math.erf %28 : vector<16x8xf32>
    %cst_18 = arith.constant 1.000000e+00 : f32
    %30 = vector.broadcast %cst_18 : f32 to vector<16x8xf32>
    %31 = arith.addf %30, %29 : vector<16x8xf32>
    %32 = arith.mulf %26, %31 : vector<16x8xf32>
    %c2 = arith.constant 2 : index
    %c0_19 = arith.constant 0 : index
    %c0_20 = arith.constant 0 : index
    %33 = vector.load %arg2[%c2, %c0_19, %c0_20] : memref<7x16x16xf32, #tpu.memory_space<vmem>>, vector<1x16x16xf32>
    %34 = vector.shape_cast %33 : vector<1x16x16xf32> to vector<16x16xf32>
    %cst_21 = arith.constant dense<0.000000e+00> : vector<16x8xf32>
    %35 = tpu.matmul %34, %32, %cst_21 {dimension_numbers = #tpu.dot_dimension_numbers<[1], [0], [0], [1], [0, 0, 1, 1], [], []>} : vector<16x16xf32>, vector<16x8xf32>, vector<16x8xf32> -> vector<16x8xf32>
    %cst_22 = arith.constant 5.000000e-01 : f32
    %36 = vector.broadcast %cst_22 : f32 to vector<16x8xf32>
    %37 = arith.mulf %36, %35 : vector<16x8xf32>
    %cst_23 = arith.constant 0.707106769 : f32
    %38 = vector.broadcast %cst_23 : f32 to vector<16x8xf32>
    %39 = arith.mulf %35, %38 : vector<16x8xf32>
    %40 = math.erf %39 : vector<16x8xf32>
    %cst_24 = arith.constant 1.000000e+00 : f32
    %41 = vector.broadcast %cst_24 : f32 to vector<16x8xf32>
    %42 = arith.addf %41, %40 : vector<16x8xf32>
    %43 = arith.mulf %37, %42 : vector<16x8xf32>
    %c3 = arith.constant 3 : index
    %c0_25 = arith.constant 0 : index
    %c0_26 = arith.constant 0 : index
    %44 = vector.load %arg2[%c3, %c0_25, %c0_26] : memref<7x16x16xf32, #tpu.memory_space<vmem>>, vector<1x16x16xf32>
    %45 = vector.shape_cast %44 : vector<1x16x16xf32> to vector<16x16xf32>
    %cst_27 = arith.constant dense<0.000000e+00> : vector<16x8xf32>
    %46 = tpu.matmul %45, %43, %cst_27 {dimension_numbers = #tpu.dot_dimension_numbers<[1], [0], [0], [1], [0, 0, 1, 1], [], []>} : vector<16x16xf32>, vector<16x8xf32>, vector<16x8xf32> -> vector<16x8xf32>
    %cst_28 = arith.constant 5.000000e-01 : f32
    %47 = vector.broadcast %cst_28 : f32 to vector<16x8xf32>
    %48 = arith.mulf %47, %46 : vector<16x8xf32>
    %cst_29 = arith.constant 0.707106769 : f32
    %49 = vector.broadcast %cst_29 : f32 to vector<16x8xf32>
    %50 = arith.mulf %46, %49 : vector<16x8xf32>
    %51 = math.erf %50 : vector<16x8xf32>
    %cst_30 = arith.constant 1.000000e+00 : f32
    %52 = vector.broadcast %cst_30 : f32 to vector<16x8xf32>
    %53 = arith.addf %52, %51 : vector<16x8xf32>
    %54 = arith.mulf %48, %53 : vector<16x8xf32>
    %c4 = arith.constant 4 : index
    %c0_31 = arith.constant 0 : index
    %c0_32 = arith.constant 0 : index
    %55 = vector.load %arg2[%c4, %c0_31, %c0_32] : memref<7x16x16xf32, #tpu.memory_space<vmem>>, vector<1x16x16xf32>
    %56 = vector.shape_cast %55 : vector<1x16x16xf32> to vector<16x16xf32>
    %cst_33 = arith.constant dense<0.000000e+00> : vector<16x8xf32>
    %57 = tpu.matmul %56, %54, %cst_33 {dimension_numbers = #tpu.dot_dimension_numbers<[1], [0], [0], [1], [0, 0, 1, 1], [], []>} : vector<16x16xf32>, vector<16x8xf32>, vector<16x8xf32> -> vector<16x8xf32>
    %cst_34 = arith.constant 5.000000e-01 : f32
    %58 = vector.broadcast %cst_34 : f32 to vector<16x8xf32>
    %59 = arith.mulf %58, %57 : vector<16x8xf32>
    %cst_35 = arith.constant 0.707106769 : f32
    %60 = vector.broadcast %cst_35 : f32 to vector<16x8xf32>
    %61 = arith.mulf %57, %60 : vector<16x8xf32>
    %62 = math.erf %61 : vector<16x8xf32>
    %cst_36 = arith.constant 1.000000e+00 : f32
    %63 = vector.broadcast %cst_36 : f32 to vector<16x8xf32>
    %64 = arith.addf %63, %62 : vector<16x8xf32>
    %65 = arith.mulf %59, %64 : vector<16x8xf32>
    %c5 = arith.constant 5 : index
    %c0_37 = arith.constant 0 : index
    %c0_38 = arith.constant 0 : index
    %66 = vector.load %arg2[%c5, %c0_37, %c0_38] : memref<7x16x16xf32, #tpu.memory_space<vmem>>, vector<1x16x16xf32>
    %67 = vector.shape_cast %66 : vector<1x16x16xf32> to vector<16x16xf32>
    %cst_39 = arith.constant dense<0.000000e+00> : vector<16x8xf32>
    %68 = tpu.matmul %67, %65, %cst_39 {dimension_numbers = #tpu.dot_dimension_numbers<[1], [0], [0], [1], [0, 0, 1, 1], [], []>} : vector<16x16xf32>, vector<16x8xf32>, vector<16x8xf32> -> vector<16x8xf32>
    %cst_40 = arith.constant 5.000000e-01 : f32
    %69 = vector.broadcast %cst_40 : f32 to vector<16x8xf32>
    %70 = arith.mulf %69, %68 : vector<16x8xf32>
    %cst_41 = arith.constant 0.707106769 : f32
    %71 = vector.broadcast %cst_41 : f32 to vector<16x8xf32>
    %72 = arith.mulf %68, %71 : vector<16x8xf32>
    %73 = math.erf %72 : vector<16x8xf32>
    %cst_42 = arith.constant 1.000000e+00 : f32
    %74 = vector.broadcast %cst_42 : f32 to vector<16x8xf32>
    %75 = arith.addf %74, %73 : vector<16x8xf32>
    %76 = arith.mulf %70, %75 : vector<16x8xf32>
    %c6 = arith.constant 6 : index
    %c0_43 = arith.constant 0 : index
    %c0_44 = arith.constant 0 : index
    %77 = vector.load %arg2[%c6, %c0_43, %c0_44] : memref<7x16x16xf32, #tpu.memory_space<vmem>>, vector<1x16x16xf32>
    %78 = vector.shape_cast %77 : vector<1x16x16xf32> to vector<16x16xf32>
    %cst_45 = arith.constant dense<0.000000e+00> : vector<16x8xf32>
    %79 = tpu.matmul %78, %76, %cst_45 {dimension_numbers = #tpu.dot_dimension_numbers<[1], [0], [0], [1], [0, 0, 1, 1], [], []>} : vector<16x16xf32>, vector<16x8xf32>, vector<16x8xf32> -> vector<16x8xf32>
    %cst_46 = arith.constant 5.000000e-01 : f32
    %80 = vector.broadcast %cst_46 : f32 to vector<16x8xf32>
    %81 = arith.mulf %80, %79 : vector<16x8xf32>
    %cst_47 = arith.constant 0.707106769 : f32
    %82 = vector.broadcast %cst_47 : f32 to vector<16x8xf32>
    %83 = arith.mulf %79, %82 : vector<16x8xf32>
    %84 = math.erf %83 : vector<16x8xf32>
    %cst_48 = arith.constant 1.000000e+00 : f32
    %85 = vector.broadcast %cst_48 : f32 to vector<16x8xf32>
    %86 = arith.addf %85, %84 : vector<16x8xf32>
    %87 = arith.mulf %81, %86 : vector<16x8xf32>
    %c0_49 = arith.constant 0 : index
    %c0_50 = arith.constant 0 : index
    %88 = vector.load %arg3[%c0_49, %c0_50] : memref<16x64xf32, #tpu.memory_space<vmem>>, vector<16x64xf32>
    %cst_51 = arith.constant dense<0.000000e+00> : vector<8x64xf32>
    %89 = tpu.matmul %87, %88, %cst_51 {dimension_numbers = #tpu.dot_dimension_numbers<[0], [0], [1], [1], [0, 1, 1, 1], [], []>} : vector<16x8xf32>, vector<16x64xf32>, vector<8x64xf32> -> vector<8x64xf32>
    %c0_52 = arith.constant 0 : index
    %c0_53 = arith.constant 0 : index
    %90 = vector.load %arg4[%c0_52, %c0_53] : memref<8x64xf32, #tpu.memory_space<vmem>>, vector<8x64xf32>
    tpu.vector_store %arg4[%c0_52, %c0_53], %89 {strides = array<i32>} : memref<8x64xf32, #tpu.memory_space<vmem>>, vector<8x64xf32>,
    return
  }
}

</mosaic_0001>

<llo_original>
// kernel: tpu_custom_call.1
$region0: #{tpu_custom_call.1}
  #allocation0 [shape = 'u32[]', space=smem, size = 0x4, offset = 0x4, fixed_abs, tag = 'smem constant byte address 0x4 - core index']
  #allocation1 [shape = 'u32[72,128]{1,0:T(1,128)}', space=vmem, size = 0x9000, scoped, tag = 'internal scratch']
  %s0 = inlined_call_operand.hbm [shape: f32[8,64], index: 0, kind: input, shape index: {}]
  %s1 = inlined_call_operand.hbm [shape: f32[16,64], index: 1, kind: input, shape index: {}]
  %s2 = inlined_call_operand.hbm [shape: f32[7,16,16], index: 2, kind: input, shape index: {}]
  %s3 = inlined_call_operand.hbm [shape: f32[16,64], index: 3, kind: input, shape index: {}]
  %s4 = inlined_call_operand.hbm [shape: f32[8,64], index: 4, kind: output, shape index: {}]
  %s5 = sld [smem:[#allocation0]]
  $region42: #{tpu_custom_call.1} parent=0
    _
  %s7 = ssub.s32 1, %s5
  %s8 = scalar_select 0, %s7, %s5
  $region1: #{tpu_custom_call.1} parent=0
    #allocation2 [shape = 'u8[4096]{0}', space=vmem, size = 0x1000, scoped, tag = 'input window, operand 0, single buffered']
    #allocation3 [shape = 's32[1]{0}', space=sflag, size = 0x4, scoped, tag = 'scoped memory for tpu_custom_call.1']
    #allocation4 [shape = 's32[1]{0}', space=sflag, size = 0x4, scoped, tag = 'scoped memory for tpu_custom_call.1']
    #allocation5 [shape = 'u8[8192]{0}', space=vmem, size = 0x2000, scoped, tag = 'input window, operand 1, single buffered']
    #allocation6 [shape = 's32[1]{0}', space=sflag, size = 0x4, scoped, tag = 'scoped memory for tpu_custom_call.1']
    #allocation7 [shape = 'u8[57344]{0}', space=vmem, size = 0xe000, scoped, tag = 'input window, operand 2, single buffered']
    #allocation8 [shape = 'u8[8192]{0}', space=vmem, size = 0x2000, scoped, tag = 'input window, operand 3, single buffered']
    #allocation9 [shape = 's32[1]{0}', space=sflag, size = 0x4, scoped, tag = 'scoped memory for tpu_custom_call.1']
    #allocation10 [shape = 'u8[4096]{0}', space=vmem, size = 0x1000, scoped, tag = 'output window, operand 0, single buffered']
    %9 = vsyncpa [#allocation3], 0
    %10 = vsyncpa [#allocation6], 0
    %11 = vsyncpa [#allocation9], 0
    %12 = vsyncpa [#allocation4], 0
    // Predicated region
    $region2: #{tpu_custom_call.1} parent=1 // pred_check
      _
    $region3: #{tpu_custom_call.1} parent=1 // pred_check_branch
      %14 = sbr.rel (0) target = $region5
    $region4: #{tpu_custom_call.1} parent=1 // pred_region
      %16 = vsyncadd [#allocation3], 0
      %s18 = sshll.u32 %s0, 4
      %s19 = int_to_ptr.hbm [resolvable:$true] %s18
      %s20 = sshll.u32 [#allocation2], 4
      %s21 = int_to_ptr.vmem [resolvable:$true] %s20
      %23 = dma.hbm_to_vmem [thread:$0]  %s19, 128, %s21, [#allocation3]
    $region5: #{tpu_custom_call.1} parent=1 // pred_fallthru
      _
    // Predicated region
    $region6: #{tpu_custom_call.1} parent=1 // pred_check
      _
    $region7: #{tpu_custom_call.1} parent=1 // pred_check_branch
      %25 = sbr.rel (0) target = $region9
    $region8: #{tpu_custom_call.1} parent=1 // pred_region
      %27 = vsyncadd [#allocation6], 0
      %s28 = sshll.u32 %s1, 4
      %s29 = int_to_ptr.hbm [resolvable:$true] %s28
      %s30 = sshll.u32 [#allocation5], 4
      %s31 = int_to_ptr.vmem [resolvable:$true] %s30
      %36 = dma.hbm_to_vmem [thread:$0]  %s29, 256, %s31, [#allocation6], 128, 128, 8
    $region9: #{tpu_custom_call.1} parent=1 // pred_fallthru
      _
    // Predicated region
    $region10: #{tpu_custom_call.1} parent=1 // pred_check
      _
    $region11: #{tpu_custom_call.1} parent=1 // pred_check_branch
      %38 = sbr.rel (0) target = $region13
    $region12: #{tpu_custom_call.1} parent=1 // pred_region
      %40 = vsyncadd [#allocation6], 0
      %s41 = sshll.u32 %s2, 4
      %s42 = int_to_ptr.hbm [resolvable:$true] %s41
      %s43 = sshll.u32 [#allocation7], 4
      %s44 = int_to_ptr.vmem [resolvable:$true] %s43
      %49 = dma.hbm_to_vmem [thread:$0]  %s42, 1792, %s44, [#allocation6], 128, 128, 8
    $region13: #{tpu_custom_call.1} parent=1 // pred_fallthru
      _
    // Predicated region
    $region14: #{tpu_custom_call.1} parent=1 // pred_check
      _
    $region15: #{tpu_custom_call.1} parent=1 // pred_check_branch
      %51 = sbr.rel (0) target = $region17
    $region16: #{tpu_custom_call.1} parent=1 // pred_region
      %53 = vsyncadd [#allocation9], 0
      %s54 = sshll.u32 %s3, 4
      %s55 = int_to_ptr.hbm [resolvable:$true] %s54
      %s56 = sshll.u32 [#allocation8], 4
      %s57 = int_to_ptr.vmem [resolvable:$true] %s56
      %62 = dma.hbm_to_vmem [thread:$0]  %s55, 256, %s57, [#allocation9], 128, 128, 8
    $region17: #{tpu_custom_call.1} parent=1 // pred_fallthru
      _
    // Predicated region
    $region18: #{tpu_custom_call.1} parent=1 // pred_check
      _
    $region19: #{tpu_custom_call.1} parent=1 // pred_check_branch
      %64 = sbr.rel (0) target = $region21
    $region20: #{tpu_custom_call.1} parent=1 // pred_region
      %66 = dma.done [#allocation3], 128
    $region21: #{tpu_custom_call.1} parent=1 // pred_fallthru
      _
    // Predicated region
    $region22: #{tpu_custom_call.1} parent=1 // pred_check
      _
    $region23: #{tpu_custom_call.1} parent=1 // pred_check_branch
      %68 = sbr.rel (0) target = $region25
    $region24: #{tpu_custom_call.1} parent=1 // pred_region
      %70 = dma.done [#allocation6], 256
    $region25: #{tpu_custom_call.1} parent=1 // pred_fallthru
      _
    // Predicated region
    $region26: #{tpu_custom_call.1} parent=1 // pred_check
      _
    $region27: #{tpu_custom_call.1} parent=1 // pred_check_branch
      %72 = sbr.rel (0) target = $region29
    $region28: #{tpu_custom_call.1} parent=1 // pred_region
      %74 = dma.done [#allocation6], 1792
    $region29: #{tpu_custom_call.1} parent=1 // pred_fallthru
      _
    // Predicated region
    $region30: #{tpu_custom_call.1} parent=1 // pred_check
      _
    $region31: #{tpu_custom_call.1} parent=1 // pred_check_branch
      %76 = sbr.rel (0) target = $region33
    $region32: #{tpu_custom_call.1} parent=1 // pred_region
      %78 = dma.done [#allocation9], 256
    $region33: #{tpu_custom_call.1} parent=1 // pred_fallthru
      _
    %v79 = vld [vmem:[#allocation2] sm:$0xff]
    %v80 = vld [vmem:[#allocation5] sm:$0xff]
    %v81 = vld [vmem:[#allocation5 + $0x8] sm:$0xff]
    %vm82 = vcmask 523264
    %v84 = vsel %vm82, %v80, 0
    %v87 = vsel %vm82, %v81, 0
    %v90 = vsel %vm82, %v79, 0
    %92 = vmatpush.xpose.msra.mxu0 0.0
    %93 = vmatpush.xpose.msra.mxu0 0.0
    %94 = vmatpush.xpose.msra.mxu0 0.0
    %95 = vmatpush.xpose.msra.mxu0 0.0
    %96 = vmatpush.xpose.msra.mxu0 0.0
    %97 = vmatpush.xpose.msra.mxu0 0.0
    %98 = vmatpush.xpose.msra.mxu0 0.0
    %99 = vmatpush.xpose.msra.mxu0 0.0
    %100 = vmatpush.xpose.msra.mxu0 0.0
    %101 = vmatpush.xpose.msra.mxu0 0.0
    %102 = vmatpush.xpose.msra.mxu0 0.0
    %103 = vmatpush.xpose.msra.mxu0 0.0
    %104 = vmatpush.xpose.msra.mxu0 0.0
    %105 = vmatpush.xpose.msra.mxu0 0.0
    %106 = vmatpush.xpose.msra.mxu0 0.0
    %107 = vmatpush.xpose.msra.mxu0 %v90
    %108 = vmatmul.f32.gmra.mxu0 %v84
    %v109 = vpop.f32.mrf.mxu0
    %v110 = vadd.f32 0.0, %v109
    %111 = vmatmul.f32.gmra.mxu0 %v87
    %v112 = vpop.f32.mrf.mxu0
    %v113 = vadd.f32 0.0, %v112
    %114 = vdwg.mxu0
    %v115 = vmul.f32 %v110, 0.5
    %v116 = vmul.f32 %v113, 0.5
    %v117 = vmul.f32 %v110, 0.70710677
    %v118 = vmul.f32 %v113, 0.70710677
    %v119 = vmul.f32 %v117, %v117
    %v120 = vmin.f32 16.0, %v119
    %v121 = vmul.f32 %v120, 2.1237322e-06
    %v122 = vadd.f32 %v121, 0.00028619796
    %v123 = vmul.f32 %v120, %v122
    %v124 = vadd.f32 %v123, 0.0036580483
    %v125 = vmul.f32 %v120, %v124
    %v126 = vadd.f32 %v125, 0.05243302
    %v127 = vmul.f32 %v120, %v126
    %v128 = vadd.f32 %v127, 0.18741608
    %v129 = vmul.f32 %v120, %v128
    %v130 = vadd.f32 %v129, 1.1283791
    %v131 = vmul.f32 %v117, %v130
    %v132 = vmul.f32 %v120, 3.8918573e-05
    %v133 = vadd.f32 %v132, 0.001143296
    %v134 = vmul.f32 %v120, %v133
    %v135 = vadd.f32 %v134, 0.014752088
    %v136 = vmul.f32 %v120, %v135
    %v137 = vadd.f32 %v136, 0.112945676
    %v138 = vmul.f32 %v120, %v137
    %v139 = vadd.f32 %v138, 0.4994258
    %v140 = vmul.f32 %v120, %v139
    %v141 = vadd.f32 %v140, 1.0
    %v142 = vrcp.pop %v141
    %v143 = vmul.f32 %v141, %v142
    %v144 = vsub.f32 1.0, %v143
    %v145 = vmul.f32 %v142, %v144
    %v146 = vadd.f32 %v142, %v145
    %vm147 = vweird.f32 %v141
    %vm148 = vweird.f32 %v142
    %vm149 = vmor %vm147, %vm148
    %v150 = vsel %vm149, %v142, %v146
    %v151 = vand.u32 2147483647, %v141
    %vm152 = vcmp.eq.f32.partialorder %v151, 8.507059e+37
    %v153 = vand.u32 %v141, 2147483648
    %v154 = vor.u32 1.1754944e-38, %v153
    %v155 = vsel %vm152, %v154, %v150
    %v156 = vmul.f32 %v131, %v155
    %v157 = vmin.f32 %v156, 1.0
    %v158 = vmax.f32 %v157, -1.0
    %v159 = vmul.f32 %v118, %v118
    %v160 = vmin.f32 16.0, %v159
    %v161 = vmul.f32 %v160, 2.1237322e-06
    %v162 = vadd.f32 %v161, 0.00028619796
    %v163 = vmul.f32 %v160, %v162
    %v164 = vadd.f32 %v163, 0.0036580483
    %v165 = vmul.f32 %v160, %v164
    %v166 = vadd.f32 %v165, 0.05243302
    %v167 = vmul.f32 %v160, %v166
    %v168 = vadd.f32 %v167, 0.18741608
    %v169 = vmul.f32 %v160, %v168
    %v170 = vadd.f32 %v169, 1.1283791
    %v171 = vmul.f32 %v118, %v170
    %v172 = vmul.f32 %v160, 3.8918573e-05
    %v173 = vadd.f32 %v172, 0.001143296
    %v174 = vmul.f32 %v160, %v173
    %v175 = vadd.f32 %v174, 0.014752088
    %v176 = vmul.f32 %v160, %v175
    %v177 = vadd.f32 %v176, 0.112945676
    %v178 = vmul.f32 %v160, %v177
    %v179 = vadd.f32 %v178, 0.4994258
    %v180 = vmul.f32 %v160, %v179
    %v181 = vadd.f32 %v180, 1.0
    %v182 = vrcp.pop %v181
    %v183 = vmul.f32 %v181, %v182
    %v184 = vsub.f32 1.0, %v183
    %v185 = vmul.f32 %v182, %v184
    %v186 = vadd.f32 %v182, %v185
    %vm187 = vweird.f32 %v181
    %vm188 = vweird.f32 %v182
    %vm189 = vmor %vm187, %vm188
    %v190 = vsel %vm189, %v182, %v186
    %v191 = vand.u32 2147483647, %v181
    %vm192 = vcmp.eq.f32.partialorder %v191, 8.507059e+37
    %v193 = vand.u32 %v181, 2147483648
    %v194 = vor.u32 1.1754944e-38, %v193
    %v195 = vsel %vm192, %v194, %v190
    %v196 = vmul.f32 %v171, %v195
    %v197 = vmin.f32 %v196, 1.0
    %v198 = vmax.f32 %v197, -1.0
    %v199 = vadd.f32 %v158, 1.0
    %v200 = vadd.f32 %v198, 1.0
    %v201 = vmul.f32 %v115, %v199
    %v202 = vmul.f32 %v116, %v200
    %v203 = vld [vmem:[#allocation7] sm:$0xff]
    %v204 = vld [vmem:[#allocation7 + $0x8] sm:$0xff]
    %vm205 = vcmask 130048
    %v207 = vsel %vm205, %v203, 0
    %v210 = vsel %vm205, %v204, 0
    %212 = vmatpush.msra.mxu0 0.0
    %213 = vmatpush.msra.mxu0 0.0
    %214 = vmatpush.msra.mxu0 0.0
    %215 = vmatpush.msra.mxu0 0.0
    %216 = vmatpush.msra.mxu0 0.0
    %217 = vmatpush.msra.mxu0 0.0
    %218 = vmatpush.msra.mxu0 0.0
    %219 = vmatpush.msra.mxu0 0.0
    %220 = vmatpush.msra.mxu0 0.0
    %221 = vmatpush.msra.mxu0 0.0
    %222 = vmatpush.msra.mxu0 0.0
    %223 = vmatpush.msra.mxu0 0.0
    %224 = vmatpush.msra.mxu0 0.0
    %225 = vmatpush.msra.mxu0 0.0
    %226 = vmatpush.msra.mxu0 %v202
    %227 = vmatpush.msra.mxu0 %v201
    %228 = vmatmul.f32.gmra.mxu0 %v207
    %v229 = vpop.f32.mrf.mxu0
    %v230 = vadd.f32 0.0, %v229
    %231 = vmatmul.f32.gmra.mxu0 %v210
    %v232 = vpop.f32.mrf.mxu0
    %v233 = vadd.f32 0.0, %v232
    %234 = vdwg.mxu0
    %v235 = vmul.f32 %v230, 0.5
    %v236 = vmul.f32 %v233, 0.5
    %v237 = vmul.f32 %v230, 0.70710677
    %v238 = vmul.f32 %v233, 0.70710677
    %v239 = vmul.f32 %v237, %v237
    %v240 = vmin.f32 16.0, %v239
    %v241 = vmul.f32 %v240, 2.1237322e-06
    %v242 = vadd.f32 %v241, 0.00028619796
    %v243 = vmul.f32 %v240, %v242
    %v244 = vadd.f32 %v243, 0.0036580483
    %v245 = vmul.f32 %v240, %v244
    %v246 = vadd.f32 %v245, 0.05243302
    %v247 = vmul.f32 %v240, %v246
    %v248 = vadd.f32 %v247, 0.18741608
    %v249 = vmul.f32 %v240, %v248
    %v250 = vadd.f32 %v249, 1.1283791
    %v251 = vmul.f32 %v237, %v250
    %v252 = vmul.f32 %v240, 3.8918573e-05
    %v253 = vadd.f32 %v252, 0.001143296
    %v254 = vmul.f32 %v240, %v253
    %v255 = vadd.f32 %v254, 0.014752088
    %v256 = vmul.f32 %v240, %v255
    %v257 = vadd.f32 %v256, 0.112945676
    %v258 = vmul.f32 %v240, %v257
    %v259 = vadd.f32 %v258, 0.4994258
    %v260 = vmul.f32 %v240, %v259
    %v261 = vadd.f32 %v260, 1.0
    %v262 = vrcp.pop %v261
    %v263 = vmul.f32 %v261, %v262
    %v264 = vsub.f32 1.0, %v263
    %v265 = vmul.f32 %v262, %v264
    %v266 = vadd.f32 %v262, %v265
    %vm267 = vweird.f32 %v261
    %vm268 = vweird.f32 %v262
    %vm269 = vmor %vm267, %vm268
    %v270 = vsel %vm269, %v262, %v266
    %v271 = vand.u32 2147483647, %v261
    %vm272 = vcmp.eq.f32.partialorder %v271, 8.507059e+37
    %v273 = vand.u32 %v261, 2147483648
    %v274 = vor.u32 1.1754944e-38, %v273
    %v275 = vsel %vm272, %v274, %v270
    %v276 = vmul.f32 %v251, %v275
    %v277 = vmin.f32 %v276, 1.0
    %v278 = vmax.f32 %v277, -1.0
    %v279 = vmul.f32 %v238, %v238
    %v280 = vmin.f32 16.0, %v279
    %v281 = vmul.f32 %v280, 2.1237322e-06
    %v282 = vadd.f32 %v281, 0.00028619796
    %v283 = vmul.f32 %v280, %v282
    %v284 = vadd.f32 %v283, 0.0036580483
    %v285 = vmul.f32 %v280, %v284
    %v286 = vadd.f32 %v285, 0.05243302
    %v287 = vmul.f32 %v280, %v286
    %v288 = vadd.f32 %v287, 0.18741608
    %v289 = vmul.f32 %v280, %v288
    %v290 = vadd.f32 %v289, 1.1283791
    %v291 = vmul.f32 %v238, %v290
    %v292 = vmul.f32 %v280, 3.8918573e-05
    %v293 = vadd.f32 %v292, 0.001143296
    %v294 = vmul.f32 %v280, %v293
    %v295 = vadd.f32 %v294, 0.014752088
    %v296 = vmul.f32 %v280, %v295
    %v297 = vadd.f32 %v296, 0.112945676
    %v298 = vmul.f32 %v280, %v297
    %v299 = vadd.f32 %v298, 0.4994258
    %v300 = vmul.f32 %v280, %v299
    %v301 = vadd.f32 %v300, 1.0
    %v302 = vrcp.pop %v301
    %v303 = vmul.f32 %v301, %v302
    %v304 = vsub.f32 1.0, %v303
    %v305 = vmul.f32 %v302, %v304
    %v306 = vadd.f32 %v302, %v305
    %vm307 = vweird.f32 %v301
    %vm308 = vweird.f32 %v302
    %vm309 = vmor %vm307, %vm308
    %v310 = vsel %vm309, %v302, %v306
    %v311 = vand.u32 2147483647, %v301
    %vm312 = vcmp.eq.f32.partialorder %v311, 8.507059e+37
    %v313 = vand.u32 %v301, 2147483648
    %v314 = vor.u32 1.1754944e-38, %v313
    %v315 = vsel %vm312, %v314, %v310
    %v316 = vmul.f32 %v291, %v315
    %v317 = vmin.f32 %v316, 1.0
    %v318 = vmax.f32 %v317, -1.0
    %v319 = vadd.f32 %v278, 1.0
    %v320 = vadd.f32 %v318, 1.0
    %v321 = vmul.f32 %v235, %v319
    %v322 = vmul.f32 %v236, %v320
    %s323 = scalar_lea.vmem [#allocation7], 16
    %v324 = vld [vmem:[%s323] sm:$0xff]
    %v325 = vld [vmem:[%s323 + $0x8] sm:$0xff]
    %v327 = vsel %vm205, %v324, 0
    %v330 = vsel %vm205, %v325, 0
    %332 = vmatpush.msra.mxu0 0.0
    %333 = vmatpush.msra.mxu0 0.0
    %334 = vmatpush.msra.mxu0 0.0
    %335 = vmatpush.msra.mxu0 0.0
    %336 = vmatpush.msra.mxu0 0.0
    %337 = vmatpush.msra.mxu0 0.0
    %338 = vmatpush.msra.mxu0 0.0
    %339 = vmatpush.msra.mxu0 0.0
    %340 = vmatpush.msra.mxu0 0.0
    %341 = vmatpush.msra.mxu0 0.0
    %342 = vmatpush.msra.mxu0 0.0
    %343 = vmatpush.msra.mxu0 0.0
    %344 = vmatpush.msra.mxu0 0.0
    %345 = vmatpush.msra.mxu0 0.0
    %346 = vmatpush.msra.mxu0 %v322
    %347 = vmatpush.msra.mxu0 %v321
    %348 = vmatmul.f32.gmra.mxu0 %v327
    %v349 = vpop.f32.mrf.mxu0
    %v350 = vadd.f32 0.0, %v349
    %351 = vmatmul.f32.gmra.mxu0 %v330
    %v352 = vpop.f32.mrf.mxu0
    %v353 = vadd.f32 0.0, %v352
    %354 = vdwg.mxu0
    %v355 = vmul.f32 %v350, 0.5
    %v356 = vmul.f32 %v353, 0.5
    %v357 = vmul.f32 %v350, 0.70710677
    %v358 = vmul.f32 %v353, 0.70710677
    %v359 = vmul.f32 %v357, %v357
    %v360 = vmin.f32 16.0, %v359
    %v361 = vmul.f32 %v360, 2.1237322e-06
    %v362 = vadd.f32 %v361, 0.00028619796
    %v363 = vmul.f32 %v360, %v362
    %v364 = vadd.f32 %v363, 0.0036580483
    %v365 = vmul.f32 %v360, %v364
    %v366 = vadd.f32 %v365, 0.05243302
    %v367 = vmul.f32 %v360, %v366
    %v368 = vadd.f32 %v367, 0.18741608
    %v369 = vmul.f32 %v360, %v368
    %v370 = vadd.f32 %v369, 1.1283791
    %v371 = vmul.f32 %v357, %v370
    %v372 = vmul.f32 %v360, 3.8918573e-05
    %v373 = vadd.f32 %v372, 0.001143296
    %v374 = vmul.f32 %v360, %v373
    %v375 = vadd.f32 %v374, 0.014752088
    %v376 = vmul.f32 %v360, %v375
    %v377 = vadd.f32 %v376, 0.112945676
    %v378 = vmul.f32 %v360, %v377
    %v379 = vadd.f32 %v378, 0.4994258
    %v380 = vmul.f32 %v360, %v379
    %v381 = vadd.f32 %v380, 1.0
    %v382 = vrcp.pop %v381
    %v383 = vmul.f32 %v381, %v382
    %v384 = vsub.f32 1.0, %v383
    %v385 = vmul.f32 %v382, %v384
    %v386 = vadd.f32 %v382, %v385
    %vm387 = vweird.f32 %v381
    %vm388 = vweird.f32 %v382
    %vm389 = vmor %vm387, %vm388
    %v390 = vsel %vm389, %v382, %v386
    %v391 = vand.u32 2147483647, %v381
    %vm392 = vcmp.eq.f32.partialorder %v391, 8.507059e+37
    %v393 = vand.u32 %v381, 2147483648
    %v394 = vor.u32 1.1754944e-38, %v393
    %v395 = vsel %vm392, %v394, %v390
    %v396 = vmul.f32 %v371, %v395
    %v397 = vmin.f32 %v396, 1.0
    %v398 = vmax.f32 %v397, -1.0
    %v399 = vmul.f32 %v358, %v358
    %v400 = vmin.f32 16.0, %v399
    %v401 = vmul.f32 %v400, 2.1237322e-06
    %v402 = vadd.f32 %v401, 0.00028619796
    %v403 = vmul.f32 %v400, %v402
    %v404 = vadd.f32 %v403, 0.0036580483
    %v405 = vmul.f32 %v400, %v404
    %v406 = vadd.f32 %v405, 0.05243302
    %v407 = vmul.f32 %v400, %v406
    %v408 = vadd.f32 %v407, 0.18741608
    %v409 = vmul.f32 %v400, %v408
    %v410 = vadd.f32 %v409, 1.1283791
    %v411 = vmul.f32 %v358, %v410
    %v412 = vmul.f32 %v400, 3.8918573e-05
    %v413 = vadd.f32 %v412, 0.001143296
    %v414 = vmul.f32 %v400, %v413
    %v415 = vadd.f32 %v414, 0.014752088
    %v416 = vmul.f32 %v400, %v415
    %v417 = vadd.f32 %v416, 0.112945676
    %v418 = vmul.f32 %v400, %v417
    %v419 = vadd.f32 %v418, 0.4994258
    %v420 = vmul.f32 %v400, %v419
    %v421 = vadd.f32 %v420, 1.0
    %v422 = vrcp.pop %v421
    %v423 = vmul.f32 %v421, %v422
    %v424 = vsub.f32 1.0, %v423
    %v425 = vmul.f32 %v422, %v424
    %v426 = vadd.f32 %v422, %v425
    %vm427 = vweird.f32 %v421
    %vm428 = vweird.f32 %v422
    %vm429 = vmor %vm427, %vm428
    %v430 = vsel %vm429, %v422, %v426
    %v431 = vand.u32 2147483647, %v421
    %vm432 = vcmp.eq.f32.partialorder %v431, 8.507059e+37
    %v433 = vand.u32 %v421, 2147483648
    %v434 = vor.u32 1.1754944e-38, %v433
    %v435 = vsel %vm432, %v434, %v430
    %v436 = vmul.f32 %v411, %v435
    %v437 = vmin.f32 %v436, 1.0
    %v438 = vmax.f32 %v437, -1.0
    %v439 = vadd.f32 %v398, 1.0
    %v440 = vadd.f32 %v438, 1.0
    %v441 = vmul.f32 %v355, %v439
    %v442 = vmul.f32 %v356, %v440
    %s443 = scalar_lea.vmem [#allocation7], 32
    %v444 = vld [vmem:[%s443] sm:$0xff]
    %v445 = vld [vmem:[%s443 + $0x8] sm:$0xff]
    %v447 = vsel %vm205, %v444, 0
    %v450 = vsel %vm205, %v445, 0
    %452 = vmatpush.msra.mxu0 0.0
    %453 = vmatpush.msra.mxu0 0.0
    %454 = vmatpush.msra.mxu0 0.0
    %455 = vmatpush.msra.mxu0 0.0
    %456 = vmatpush.msra.mxu0 0.0
    %457 = vmatpush.msra.mxu0 0.0
    %458 = vmatpush.msra.mxu0 0.0
    %459 = vmatpush.msra.mxu0 0.0
    %460 = vmatpush.msra.mxu0 0.0
    %461 = vmatpush.msra.mxu0 0.0
    %462 = vmatpush.msra.mxu0 0.0
    %463 = vmatpush.msra.mxu0 0.0
    %464 = vmatpush.msra.mxu0 0.0
    %465 = vmatpush.msra.mxu0 0.0
    %466 = vmatpush.msra.mxu0 %v442
    %467 = vmatpush.msra.mxu0 %v441
    %468 = vmatmul.f32.gmra.mxu0 %v447
    %v469 = vpop.f32.mrf.mxu0
    %v470 = vadd.f32 0.0, %v469
    %471 = vmatmul.f32.gmra.mxu0 %v450
    %v472 = vpop.f32.mrf.mxu0
    %v473 = vadd.f32 0.0, %v472
    %474 = vdwg.mxu0
    %v475 = vmul.f32 %v470, 0.5
    %v476 = vmul.f32 %v473, 0.5
    %v477 = vmul.f32 %v470, 0.70710677
    %v478 = vmul.f32 %v473, 0.70710677
    %v479 = vmul.f32 %v477, %v477
    %v480 = vmin.f32 16.0, %v479
    %v481 = vmul.f32 %v480, 2.1237322e-06
    %v482 = vadd.f32 %v481, 0.00028619796
    %v483 = vmul.f32 %v480, %v482
    %v484 = vadd.f32 %v483, 0.0036580483
    %v485 = vmul.f32 %v480, %v484
    %v486 = vadd.f32 %v485, 0.05243302
    %v487 = vmul.f32 %v480, %v486
    %v488 = vadd.f32 %v487, 0.18741608
    %v489 = vmul.f32 %v480, %v488
    %v490 = vadd.f32 %v489, 1.1283791
    %v491 = vmul.f32 %v477, %v490
    %v492 = vmul.f32 %v480, 3.8918573e-05
    %v493 = vadd.f32 %v492, 0.001143296
    %v494 = vmul.f32 %v480, %v493
    %v495 = vadd.f32 %v494, 0.014752088
    %v496 = vmul.f32 %v480, %v495
    %v497 = vadd.f32 %v496, 0.112945676
    %v498 = vmul.f32 %v480, %v497
    %v499 = vadd.f32 %v498, 0.4994258
    %v500 = vmul.f32 %v480, %v499
    %v501 = vadd.f32 %v500, 1.0
    %v502 = vrcp.pop %v501
    %v503 = vmul.f32 %v501, %v502
    %v504 = vsub.f32 1.0, %v503
    %v505 = vmul.f32 %v502, %v504
    %v506 = vadd.f32 %v502, %v505
    %vm507 = vweird.f32 %v501
    %vm508 = vweird.f32 %v502
    %vm509 = vmor %vm507, %vm508
    %v510 = vsel %vm509, %v502, %v506
    %v511 = vand.u32 2147483647, %v501
    %vm512 = vcmp.eq.f32.partialorder %v511, 8.507059e+37
    %v513 = vand.u32 %v501, 2147483648
    %v514 = vor.u32 1.1754944e-38, %v513
    %v515 = vsel %vm512, %v514, %v510
    %v516 = vmul.f32 %v491, %v515
    %v517 = vmin.f32 %v516, 1.0
    %v518 = vmax.f32 %v517, -1.0
    %v519 = vmul.f32 %v478, %v478
    %v520 = vmin.f32 16.0, %v519
    %v521 = vmul.f32 %v520, 2.1237322e-06
    %v522 = vadd.f32 %v521, 0.00028619796
    %v523 = vmul.f32 %v520, %v522
    %v524 = vadd.f32 %v523, 0.0036580483
    %v525 = vmul.f32 %v520, %v524
    %v526 = vadd.f32 %v525, 0.05243302
    %v527 = vmul.f32 %v520, %v526
    %v528 = vadd.f32 %v527, 0.18741608
    %v529 = vmul.f32 %v520, %v528
    %v530 = vadd.f32 %v529, 1.1283791
    %v531 = vmul.f32 %v478, %v530
    %v532 = vmul.f32 %v520, 3.8918573e-05
    %v533 = vadd.f32 %v532, 0.001143296
    %v534 = vmul.f32 %v520, %v533
    %v535 = vadd.f32 %v534, 0.014752088
    %v536 = vmul.f32 %v520, %v535
    %v537 = vadd.f32 %v536, 0.112945676
    %v538 = vmul.f32 %v520, %v537
    %v539 = vadd.f32 %v538, 0.4994258
    %v540 = vmul.f32 %v520, %v539
    %v541 = vadd.f32 %v540, 1.0
    %v542 = vrcp.pop %v541
    %v543 = vmul.f32 %v541, %v542
    %v544 = vsub.f32 1.0, %v543
    %v545 = vmul.f32 %v542, %v544
    %v546 = vadd.f32 %v542, %v545
    %vm547 = vweird.f32 %v541
    %vm548 = vweird.f32 %v542
    %vm549 = vmor %vm547, %vm548
    %v550 = vsel %vm549, %v542, %v546
    %v551 = vand.u32 2147483647, %v541
    %vm552 = vcmp.eq.f32.partialorder %v551, 8.507059e+37
    %v553 = vand.u32 %v541, 2147483648
    %v554 = vor.u32 1.1754944e-38, %v553
    %v555 = vsel %vm552, %v554, %v550
    %v556 = vmul.f32 %v531, %v555
    %v557 = vmin.f32 %v556, 1.0
    %v558 = vmax.f32 %v557, -1.0
    %v559 = vadd.f32 %v518, 1.0
    %v560 = vadd.f32 %v558, 1.0
    %v561 = vmul.f32 %v475, %v559
    %v562 = vmul.f32 %v476, %v560
    %s563 = scalar_lea.vmem [#allocation7], 48
    %v564 = vld [vmem:[%s563] sm:$0xff]
    %v565 = vld [vmem:[%s563 + $0x8] sm:$0xff]
    %v567 = vsel %vm205, %v564, 0
    %v570 = vsel %vm205, %v565, 0
    %572 = vmatpush.msra.mxu0 0.0
    %573 = vmatpush.msra.mxu0 0.0
    %574 = vmatpush.msra.mxu0 0.0
    %575 = vmatpush.msra.mxu0 0.0
    %576 = vmatpush.msra.mxu0 0.0
    %577 = vmatpush.msra.mxu0 0.0
    %578 = vmatpush.msra.mxu0 0.0
    %579 = vmatpush.msra.mxu0 0.0
    %580 = vmatpush.msra.mxu0 0.0
    %581 = vmatpush.msra.mxu0 0.0
    %582 = vmatpush.msra.mxu0 0.0
    %583 = vmatpush.msra.mxu0 0.0
    %584 = vmatpush.msra.mxu0 0.0
    %585 = vmatpush.msra.mxu0 0.0
    %586 = vmatpush.msra.mxu0 %v562
    %587 = vmatpush.msra.mxu0 %v561
    %588 = vmatmul.f32.gmra.mxu0 %v567
    %v589 = vpop.f32.mrf.mxu0
    %v590 = vadd.f32 0.0, %v589
    %591 = vmatmul.f32.gmra.mxu0 %v570
    %v592 = vpop.f32.mrf.mxu0
    %v593 = vadd.f32 0.0, %v592
    %594 = vdwg.mxu0
    %v595 = vmul.f32 %v590, 0.5
    %v596 = vmul.f32 %v593, 0.5
    %v597 = vmul.f32 %v590, 0.70710677
    %v598 = vmul.f32 %v593, 0.70710677
    %v599 = vmul.f32 %v597, %v597
    %v600 = vmin.f32 16.0, %v599
    %v601 = vmul.f32 %v600, 2.1237322e-06
    %v602 = vadd.f32 %v601, 0.00028619796
    %v603 = vmul.f32 %v600, %v602
    %v604 = vadd.f32 %v603, 0.0036580483
    %v605 = vmul.f32 %v600, %v604
    %v606 = vadd.f32 %v605, 0.05243302
    %v607 = vmul.f32 %v600, %v606
    %v608 = vadd.f32 %v607, 0.18741608
    %v609 = vmul.f32 %v600, %v608
    %v610 = vadd.f32 %v609, 1.1283791
    %v611 = vmul.f32 %v597, %v610
    %v612 = vmul.f32 %v600, 3.8918573e-05
    %v613 = vadd.f32 %v612, 0.001143296
    %v614 = vmul.f32 %v600, %v613
    %v615 = vadd.f32 %v614, 0.014752088
    %v616 = vmul.f32 %v600, %v615
    %v617 = vadd.f32 %v616, 0.112945676
    %v618 = vmul.f32 %v600, %v617
    %v619 = vadd.f32 %v618, 0.4994258
    %v620 = vmul.f32 %v600, %v619
    %v621 = vadd.f32 %v620, 1.0
    %v622 = vrcp.pop %v621
    %v623 = vmul.f32 %v621, %v622
    %v624 = vsub.f32 1.0, %v623
    %v625 = vmul.f32 %v622, %v624
    %v626 = vadd.f32 %v622, %v625
    %vm627 = vweird.f32 %v621
    %vm628 = vweird.f32 %v622
    %vm629 = vmor %vm627, %vm628
    %v630 = vsel %vm629, %v622, %v626
    %v631 = vand.u32 2147483647, %v621
    %vm632 = vcmp.eq.f32.partialorder %v631, 8.507059e+37
    %v633 = vand.u32 %v621, 2147483648
    %v634 = vor.u32 1.1754944e-38, %v633
    %v635 = vsel %vm632, %v634, %v630
    %v636 = vmul.f32 %v611, %v635
    %v637 = vmin.f32 %v636, 1.0
    %v638 = vmax.f32 %v637, -1.0
    %v639 = vmul.f32 %v598, %v598
    %v640 = vmin.f32 16.0, %v639
    %v641 = vmul.f32 %v640, 2.1237322e-06
    %v642 = vadd.f32 %v641, 0.00028619796
    %v643 = vmul.f32 %v640, %v642
    %v644 = vadd.f32 %v643, 0.0036580483
    %v645 = vmul.f32 %v640, %v644
    %v646 = vadd.f32 %v645, 0.05243302
    %v647 = vmul.f32 %v640, %v646
    %v648 = vadd.f32 %v647, 0.18741608
    %v649 = vmul.f32 %v640, %v648
    %v650 = vadd.f32 %v649, 1.1283791
    %v651 = vmul.f32 %v598, %v650
    %v652 = vmul.f32 %v640, 3.8918573e-05
    %v653 = vadd.f32 %v652, 0.001143296
    %v654 = vmul.f32 %v640, %v653
    %v655 = vadd.f32 %v654, 0.014752088
    %v656 = vmul.f32 %v640, %v655
    %v657 = vadd.f32 %v656, 0.112945676
    %v658 = vmul.f32 %v640, %v657
    %v659 = vadd.f32 %v658, 0.4994258
    %v660 = vmul.f32 %v640, %v659
    %v661 = vadd.f32 %v660, 1.0
    %v662 = vrcp.pop %v661
    %v663 = vmul.f32 %v661, %v662
    %v664 = vsub.f32 1.0, %v663
    %v665 = vmul.f32 %v662, %v664
    %v666 = vadd.f32 %v662, %v665
    %vm667 = vweird.f32 %v661
    %vm668 = vweird.f32 %v662
    %vm669 = vmor %vm667, %vm668
    %v670 = vsel %vm669, %v662, %v666
    %v671 = vand.u32 2147483647, %v661
    %vm672 = vcmp.eq.f32.partialorder %v671, 8.507059e+37
    %v673 = vand.u32 %v661, 2147483648
    %v674 = vor.u32 1.1754944e-38, %v673
    %v675 = vsel %vm672, %v674, %v670
    %v676 = vmul.f32 %v651, %v675
    %v677 = vmin.f32 %v676, 1.0
    %v678 = vmax.f32 %v677, -1.0
    %v679 = vadd.f32 %v638, 1.0
    %v680 = vadd.f32 %v678, 1.0
    %v681 = vmul.f32 %v595, %v679
    %v682 = vmul.f32 %v596, %v680
    %s683 = scalar_lea.vmem [#allocation7], 64
    %v684 = vld [vmem:[%s683] sm:$0xff]
    %v685 = vld [vmem:[%s683 + $0x8] sm:$0xff]
    %v687 = vsel %vm205, %v684, 0
    %v690 = vsel %vm205, %v685, 0
    %692 = vmatpush.msra.mxu0 0.0
    %693 = vmatpush.msra.mxu0 0.0
    %694 = vmatpush.msra.mxu0 0.0
    %695 = vmatpush.msra.mxu0 0.0
    %696 = vmatpush.msra.mxu0 0.0
    %697 = vmatpush.msra.mxu0 0.0
    %698 = vmatpush.msra.mxu0 0.0
    %699 = vmatpush.msra.mxu0 0.0
    %700 = vmatpush.msra.mxu0 0.0
    %701 = vmatpush.msra.mxu0 0.0
    %702 = vmatpush.msra.mxu0 0.0
    %703 = vmatpush.msra.mxu0 0.0
    %704 = vmatpush.msra.mxu0 0.0
    %705 = vmatpush.msra.mxu0 0.0
    %706 = vmatpush.msra.mxu0 %v682
    %707 = vmatpush.msra.mxu0 %v681
    %708 = vmatmul.f32.gmra.mxu0 %v687
    %v709 = vpop.f32.mrf.mxu0
    %v710 = vadd.f32 0.0, %v709
    %711 = vmatmul.f32.gmra.mxu0 %v690
    %v712 = vpop.f32.mrf.mxu0
    %v713 = vadd.f32 0.0, %v712
    %714 = vdwg.mxu0
    %v715 = vmul.f32 %v710, 0.5
    %v716 = vmul.f32 %v713, 0.5
    %v717 = vmul.f32 %v710, 0.70710677
    %v718 = vmul.f32 %v713, 0.70710677
    %v719 = vmul.f32 %v717, %v717
    %v720 = vmin.f32 16.0, %v719
    %v721 = vmul.f32 %v720, 2.1237322e-06
    %v722 = vadd.f32 %v721, 0.00028619796
    %v723 = vmul.f32 %v720, %v722
    %v724 = vadd.f32 %v723, 0.0036580483
    %v725 = vmul.f32 %v720, %v724
    %v726 = vadd.f32 %v725, 0.05243302
    %v727 = vmul.f32 %v720, %v726
    %v728 = vadd.f32 %v727, 0.18741608
    %v729 = vmul.f32 %v720, %v728
    %v730 = vadd.f32 %v729, 1.1283791
    %v731 = vmul.f32 %v717, %v730
    %v732 = vmul.f32 %v720, 3.8918573e-05
    %v733 = vadd.f32 %v732, 0.001143296
    %v734 = vmul.f32 %v720, %v733
    %v735 = vadd.f32 %v734, 0.014752088
    %v736 = vmul.f32 %v720, %v735
    %v737 = vadd.f32 %v736, 0.112945676
    %v738 = vmul.f32 %v720, %v737
    %v739 = vadd.f32 %v738, 0.4994258
    %v740 = vmul.f32 %v720, %v739
    %v741 = vadd.f32 %v740, 1.0
    %v742 = vrcp.pop %v741
    %v743 = vmul.f32 %v741, %v742
    %v744 = vsub.f32 1.0, %v743
    %v745 = vmul.f32 %v742, %v744
    %v746 = vadd.f32 %v742, %v745
    %vm747 = vweird.f32 %v741
    %vm748 = vweird.f32 %v742
    %vm749 = vmor %vm747, %vm748
    %v750 = vsel %vm749, %v742, %v746
    %v751 = vand.u32 2147483647, %v741
    %vm752 = vcmp.eq.f32.partialorder %v751, 8.507059e+37
    %v753 = vand.u32 %v741, 2147483648
    %v754 = vor.u32 1.1754944e-38, %v753
    %v755 = vsel %vm752, %v754, %v750
    %v756 = vmul.f32 %v731, %v755
    %v757 = vmin.f32 %v756, 1.0
    %v758 = vmax.f32 %v757, -1.0
    %v759 = vmul.f32 %v718, %v718
    %v760 = vmin.f32 16.0, %v759
    %v761 = vmul.f32 %v760, 2.1237322e-06
    %v762 = vadd.f32 %v761, 0.00028619796
    %v763 = vmul.f32 %v760, %v762
    %v764 = vadd.f32 %v763, 0.0036580483
    %v765 = vmul.f32 %v760, %v764
    %v766 = vadd.f32 %v765, 0.05243302
    %v767 = vmul.f32 %v760, %v766
    %v768 = vadd.f32 %v767, 0.18741608
    %v769 = vmul.f32 %v760, %v768
    %v770 = vadd.f32 %v769, 1.1283791
    %v771 = vmul.f32 %v718, %v770
    %v772 = vmul.f32 %v760, 3.8918573e-05
    %v773 = vadd.f32 %v772, 0.001143296
    %v774 = vmul.f32 %v760, %v773
    %v775 = vadd.f32 %v774, 0.014752088
    %v776 = vmul.f32 %v760, %v775
    %v777 = vadd.f32 %v776, 0.112945676
    %v778 = vmul.f32 %v760, %v777
    %v779 = vadd.f32 %v778, 0.4994258
    %v780 = vmul.f32 %v760, %v779
    %v781 = vadd.f32 %v780, 1.0
    %v782 = vrcp.pop %v781
    %v783 = vmul.f32 %v781, %v782
    %v784 = vsub.f32 1.0, %v783
    %v785 = vmul.f32 %v782, %v784
    %v786 = vadd.f32 %v782, %v785
    %vm787 = vweird.f32 %v781
    %vm788 = vweird.f32 %v782
    %vm789 = vmor %vm787, %vm788
    %v790 = vsel %vm789, %v782, %v786
    %v791 = vand.u32 2147483647, %v781
    %vm792 = vcmp.eq.f32.partialorder %v791, 8.507059e+37
    %v793 = vand.u32 %v781, 2147483648
    %v794 = vor.u32 1.1754944e-38, %v793
    %v795 = vsel %vm792, %v794, %v790
    %v796 = vmul.f32 %v771, %v795
    %v797 = vmin.f32 %v796, 1.0
    %v798 = vmax.f32 %v797, -1.0
    %v799 = vadd.f32 %v758, 1.0
    %v800 = vadd.f32 %v798, 1.0
    %v801 = vmul.f32 %v715, %v799
    %v802 = vmul.f32 %v716, %v800
    %s803 = scalar_lea.vmem [#allocation7], 80
    %v804 = vld [vmem:[%s803] sm:$0xff]
    %v805 = vld [vmem:[%s803 + $0x8] sm:$0xff]
    %v807 = vsel %vm205, %v804, 0
    %v810 = vsel %vm205, %v805, 0
    %812 = vmatpush.msra.mxu0 0.0
    %813 = vmatpush.msra.mxu0 0.0
    %814 = vmatpush.msra.mxu0 0.0
    %815 = vmatpush.msra.mxu0 0.0
    %816 = vmatpush.msra.mxu0 0.0
    %817 = vmatpush.msra.mxu0 0.0
    %818 = vmatpush.msra.mxu0 0.0
    %819 = vmatpush.msra.mxu0 0.0
    %820 = vmatpush.msra.mxu0 0.0
    %821 = vmatpush.msra.mxu0 0.0
    %822 = vmatpush.msra.mxu0 0.0
    %823 = vmatpush.msra.mxu0 0.0
    %824 = vmatpush.msra.mxu0 0.0
    %825 = vmatpush.msra.mxu0 0.0
    %826 = vmatpush.msra.mxu0 %v802
    %827 = vmatpush.msra.mxu0 %v801
    %828 = vmatmul.f32.gmra.mxu0 %v807
    %v829 = vpop.f32.mrf.mxu0
    %v830 = vadd.f32 0.0, %v829
    %831 = vmatmul.f32.gmra.mxu0 %v810
    %v832 = vpop.f32.mrf.mxu0
    %v833 = vadd.f32 0.0, %v832
    %834 = vdwg.mxu0
    %v835 = vmul.f32 %v830, 0.5
    %v836 = vmul.f32 %v833, 0.5
    %v837 = vmul.f32 %v830, 0.70710677
    %v838 = vmul.f32 %v833, 0.70710677
    %v839 = vmul.f32 %v837, %v837
    %v840 = vmin.f32 16.0, %v839
    %v841 = vmul.f32 %v840, 2.1237322e-06
    %v842 = vadd.f32 %v841, 0.00028619796
    %v843 = vmul.f32 %v840, %v842
    %v844 = vadd.f32 %v843, 0.0036580483
    %v845 = vmul.f32 %v840, %v844
    %v846 = vadd.f32 %v845, 0.05243302
    %v847 = vmul.f32 %v840, %v846
    %v848 = vadd.f32 %v847, 0.18741608
    %v849 = vmul.f32 %v840, %v848
    %v850 = vadd.f32 %v849, 1.1283791
    %v851 = vmul.f32 %v837, %v850
    %v852 = vmul.f32 %v840, 3.8918573e-05
    %v853 = vadd.f32 %v852, 0.001143296
    %v854 = vmul.f32 %v840, %v853
    %v855 = vadd.f32 %v854, 0.014752088
    %v856 = vmul.f32 %v840, %v855
    %v857 = vadd.f32 %v856, 0.112945676
    %v858 = vmul.f32 %v840, %v857
    %v859 = vadd.f32 %v858, 0.4994258
    %v860 = vmul.f32 %v840, %v859
    %v861 = vadd.f32 %v860, 1.0
    %v862 = vrcp.pop %v861
    %v863 = vmul.f32 %v861, %v862
    %v864 = vsub.f32 1.0, %v863
    %v865 = vmul.f32 %v862, %v864
    %v866 = vadd.f32 %v862, %v865
    %vm867 = vweird.f32 %v861
    %vm868 = vweird.f32 %v862
    %vm869 = vmor %vm867, %vm868
    %v870 = vsel %vm869, %v862, %v866
    %v871 = vand.u32 2147483647, %v861
    %vm872 = vcmp.eq.f32.partialorder %v871, 8.507059e+37
    %v873 = vand.u32 %v861, 2147483648
    %v874 = vor.u32 1.1754944e-38, %v873
    %v875 = vsel %vm872, %v874, %v870
    %v876 = vmul.f32 %v851, %v875
    %v877 = vmin.f32 %v876, 1.0
    %v878 = vmax.f32 %v877, -1.0
    %v879 = vmul.f32 %v838, %v838
    %v880 = vmin.f32 16.0, %v879
    %v881 = vmul.f32 %v880, 2.1237322e-06
    %v882 = vadd.f32 %v881, 0.00028619796
    %v883 = vmul.f32 %v880, %v882
    %v884 = vadd.f32 %v883, 0.0036580483
    %v885 = vmul.f32 %v880, %v884
    %v886 = vadd.f32 %v885, 0.05243302
    %v887 = vmul.f32 %v880, %v886
    %v888 = vadd.f32 %v887, 0.18741608
    %v889 = vmul.f32 %v880, %v888
    %v890 = vadd.f32 %v889, 1.1283791
    %v891 = vmul.f32 %v838, %v890
    %v892 = vmul.f32 %v880, 3.8918573e-05
    %v893 = vadd.f32 %v892, 0.001143296
    %v894 = vmul.f32 %v880, %v893
    %v895 = vadd.f32 %v894, 0.014752088
    %v896 = vmul.f32 %v880, %v895
    %v897 = vadd.f32 %v896, 0.112945676
    %v898 = vmul.f32 %v880, %v897
    %v899 = vadd.f32 %v898, 0.4994258
    %v900 = vmul.f32 %v880, %v899
    %v901 = vadd.f32 %v900, 1.0
    %v902 = vrcp.pop %v901
    %v903 = vmul.f32 %v901, %v902
    %v904 = vsub.f32 1.0, %v903
    %v905 = vmul.f32 %v902, %v904
    %v906 = vadd.f32 %v902, %v905
    %vm907 = vweird.f32 %v901
    %vm908 = vweird.f32 %v902
    %vm909 = vmor %vm907, %vm908
    %v910 = vsel %vm909, %v902, %v906
    %v911 = vand.u32 2147483647, %v901
    %vm912 = vcmp.eq.f32.partialorder %v911, 8.507059e+37
    %v913 = vand.u32 %v901, 2147483648
    %v914 = vor.u32 1.1754944e-38, %v913
    %v915 = vsel %vm912, %v914, %v910
    %v916 = vmul.f32 %v891, %v915
    %v917 = vmin.f32 %v916, 1.0
    %v918 = vmax.f32 %v917, -1.0
    %v919 = vadd.f32 %v878, 1.0
    %v920 = vadd.f32 %v918, 1.0
    %v921 = vmul.f32 %v835, %v919
    %v922 = vmul.f32 %v836, %v920
    %s923 = scalar_lea.vmem [#allocation7], 96
    %v924 = vld [vmem:[%s923] sm:$0xff]
    %v925 = vld [vmem:[%s923 + $0x8] sm:$0xff]
    %v927 = vsel %vm205, %v924, 0
    %v930 = vsel %vm205, %v925, 0
    %932 = vmatpush.msra.mxu0 0.0
    %933 = vmatpush.msra.mxu0 0.0
    %934 = vmatpush.msra.mxu0 0.0
    %935 = vmatpush.msra.mxu0 0.0
    %936 = vmatpush.msra.mxu0 0.0
    %937 = vmatpush.msra.mxu0 0.0
    %938 = vmatpush.msra.mxu0 0.0
    %939 = vmatpush.msra.mxu0 0.0
    %940 = vmatpush.msra.mxu0 0.0
    %941 = vmatpush.msra.mxu0 0.0
    %942 = vmatpush.msra.mxu0 0.0
    %943 = vmatpush.msra.mxu0 0.0
    %944 = vmatpush.msra.mxu0 0.0
    %945 = vmatpush.msra.mxu0 0.0
    %946 = vmatpush.msra.mxu0 %v922
    %947 = vmatpush.msra.mxu0 %v921
    %948 = vmatmul.f32.gmra.mxu0 %v927
    %v949 = vpop.f32.mrf.mxu0
    %v950 = vadd.f32 0.0, %v949
    %951 = vmatmul.f32.gmra.mxu0 %v930
    %v952 = vpop.f32.mrf.mxu0
    %v953 = vadd.f32 0.0, %v952
    %954 = vdwg.mxu0
    %v955 = vmul.f32 %v950, 0.5
    %v956 = vmul.f32 %v953, 0.5
    %v957 = vmul.f32 %v950, 0.70710677
    %v958 = vmul.f32 %v953, 0.70710677
    %v959 = vmul.f32 %v957, %v957
    %v960 = vmin.f32 16.0, %v959
    %v961 = vmul.f32 %v960, 2.1237322e-06
    %v962 = vadd.f32 %v961, 0.00028619796
    %v963 = vmul.f32 %v960, %v962
    %v964 = vadd.f32 %v963, 0.0036580483
    %v965 = vmul.f32 %v960, %v964
    %v966 = vadd.f32 %v965, 0.05243302
    %v967 = vmul.f32 %v960, %v966
    %v968 = vadd.f32 %v967, 0.18741608
    %v969 = vmul.f32 %v960, %v968
    %v970 = vadd.f32 %v969, 1.1283791
    %v971 = vmul.f32 %v957, %v970
    %v972 = vmul.f32 %v960, 3.8918573e-05
    %v973 = vadd.f32 %v972, 0.001143296
    %v974 = vmul.f32 %v960, %v973
    %v975 = vadd.f32 %v974, 0.014752088
    %v976 = vmul.f32 %v960, %v975
    %v977 = vadd.f32 %v976, 0.112945676
    %v978 = vmul.f32 %v960, %v977
    %v979 = vadd.f32 %v978, 0.4994258
    %v980 = vmul.f32 %v960, %v979
    %v981 = vadd.f32 %v980, 1.0
    %v982 = vrcp.pop %v981
    %v983 = vmul.f32 %v981, %v982
    %v984 = vsub.f32 1.0, %v983
    %v985 = vmul.f32 %v982, %v984
    %v986 = vadd.f32 %v982, %v985
    %vm987 = vweird.f32 %v981
    %vm988 = vweird.f32 %v982
    %vm989 = vmor %vm987, %vm988
    %v990 = vsel %vm989, %v982, %v986
    %v991 = vand.u32 2147483647, %v981
    %vm992 = vcmp.eq.f32.partialorder %v991, 8.507059e+37
    %v993 = vand.u32 %v981, 2147483648
    %v994 = vor.u32 1.1754944e-38, %v993
    %v995 = vsel %vm992, %v994, %v990
    %v996 = vmul.f32 %v971, %v995
    %v997 = vmin.f32 %v996, 1.0
    %v998 = vmax.f32 %v997, -1.0
    %v999 = vmul.f32 %v958, %v958
    %v1000 = vmin.f32 16.0, %v999
    %v1001 = vmul.f32 %v1000, 2.1237322e-06
    %v1002 = vadd.f32 %v1001, 0.00028619796
    %v1003 = vmul.f32 %v1000, %v1002
    %v1004 = vadd.f32 %v1003, 0.0036580483
    %v1005 = vmul.f32 %v1000, %v1004
    %v1006 = vadd.f32 %v1005, 0.05243302
    %v1007 = vmul.f32 %v1000, %v1006
    %v1008 = vadd.f32 %v1007, 0.18741608
    %v1009 = vmul.f32 %v1000, %v1008
    %v1010 = vadd.f32 %v1009, 1.1283791
    %v1011 = vmul.f32 %v958, %v1010
    %v1012 = vmul.f32 %v1000, 3.8918573e-05
    %v1013 = vadd.f32 %v1012, 0.001143296
    %v1014 = vmul.f32 %v1000, %v1013
    %v1015 = vadd.f32 %v1014, 0.014752088
    %v1016 = vmul.f32 %v1000, %v1015
    %v1017 = vadd.f32 %v1016, 0.112945676
    %v1018 = vmul.f32 %v1000, %v1017
    %v1019 = vadd.f32 %v1018, 0.4994258
    %v1020 = vmul.f32 %v1000, %v1019
    %v1021 = vadd.f32 %v1020, 1.0
    %v1022 = vrcp.pop %v1021
    %v1023 = vmul.f32 %v1021, %v1022
    %v1024 = vsub.f32 1.0, %v1023
    %v1025 = vmul.f32 %v1022, %v1024
    %v1026 = vadd.f32 %v1022, %v1025
    %vm1027 = vweird.f32 %v1021
    %vm1028 = vweird.f32 %v1022
    %vm1029 = vmor %vm1027, %vm1028
    %v1030 = vsel %vm1029, %v1022, %v1026
    %v1031 = vand.u32 2147483647, %v1021
    %vm1032 = vcmp.eq.f32.partialorder %v1031, 8.507059e+37
    %v1033 = vand.u32 %v1021, 2147483648
    %v1034 = vor.u32 1.1754944e-38, %v1033
    %v1035 = vsel %vm1032, %v1034, %v1030
    %v1036 = vmul.f32 %v1011, %v1035
    %v1037 = vmin.f32 %v1036, 1.0
    %v1038 = vmax.f32 %v1037, -1.0
    %v1039 = vadd.f32 %v998, 1.0
    %v1040 = vadd.f32 %v1038, 1.0
    %v1041 = vmul.f32 %v955, %v1039
    %v1042 = vmul.f32 %v956, %v1040
    %v1043 = vld [vmem:[#allocation8] sm:$0xff]
    %v1044 = vld [vmem:[#allocation8 + $0x8] sm:$0xff]
    %1045 = vxpose.xlu0.b32.start [1/16] %v1041, 128
    %1046 = vxpose.xlu0.b32.cont [2/16] %v1042, 128
    %1047 = vxpose.xlu0.b32.cont [3/16] 0.0, 128
    %1048 = vxpose.xlu0.b32.cont [4/16] 0.0, 128
    %1049 = vxpose.xlu0.b32.cont [5/16] 0.0, 128
    %1050 = vxpose.xlu0.b32.cont [6/16] 0.0, 128
    %1051 = vxpose.xlu0.b32.cont [7/16] 0.0, 128
    %1052 = vxpose.xlu0.b32.cont [8/16] 0.0, 128
    %1053 = vxpose.xlu0.b32.cont [9/16] 0.0, 128
    %1054 = vxpose.xlu0.b32.cont [10/16] 0.0, 128
    %1055 = vxpose.xlu0.b32.cont [11/16] 0.0, 128
    %1056 = vxpose.xlu0.b32.cont [12/16] 0.0, 128
    %1057 = vxpose.xlu0.b32.cont [13/16] 0.0, 128
    %1058 = vxpose.xlu0.b32.cont [14/16] 0.0, 128
    %1059 = vxpose.xlu0.b32.cont [15/16] 0.0, 128
    %1060 = vxpose.xlu0.b32.end [16/16] 0.0, 128
    %v1061 = vpop.trf.xlu0
    %v1062 = vpop.trf.xlu0
    %v1063 = vpop.trf.xlu0
    %v1064 = vpop.trf.xlu0
    %v1065 = vpop.trf.xlu0
    %v1066 = vpop.trf.xlu0
    %v1067 = vpop.trf.xlu0
    %v1068 = vpop.trf.xlu0
    %v1069 = vpop.trf.xlu0
    %v1070 = vpop.trf.xlu0
    %v1071 = vpop.trf.xlu0
    %v1072 = vpop.trf.xlu0
    %v1073 = vpop.trf.xlu0
    %v1074 = vpop.trf.xlu0
    %v1075 = vpop.trf.xlu0
    %v1076 = vpop.trf.xlu0
    %v1078 = vsel %vm205, %v1061, 0
    %1080 = vmatpush.msra.mxu0 0.0
    %1081 = vmatpush.msra.mxu0 0.0
    %1082 = vmatpush.msra.mxu0 0.0
    %1083 = vmatpush.msra.mxu0 0.0
    %1084 = vmatpush.msra.mxu0 0.0
    %1085 = vmatpush.msra.mxu0 0.0
    %1086 = vmatpush.msra.mxu0 0.0
    %1087 = vmatpush.msra.mxu0 0.0
    %1088 = vmatpush.msra.mxu0 0.0
    %1089 = vmatpush.msra.mxu0 0.0
    %1090 = vmatpush.msra.mxu0 0.0
    %1091 = vmatpush.msra.mxu0 0.0
    %1092 = vmatpush.msra.mxu0 0.0
    %1093 = vmatpush.msra.mxu0 0.0
    %1094 = vmatpush.msra.mxu0 %v1044
    %1095 = vmatpush.msra.mxu0 %v1043
    %1096 = vmatmul.f32.gmra.mxu0 %v1078
    %v1097 = vpop.f32.mrf.mxu0
    %v1098 = vadd.f32 0.0, %v1097
    %1099 = vdwg.mxu0
    %1100 = vst.msk [vmem:[#allocation10] sm:$0xff] %vm82, %v1098
    // Predicated region
    $region34: #{tpu_custom_call.1} parent=1 // pred_check
      _
    $region35: #{tpu_custom_call.1} parent=1 // pred_check_branch
      %1102 = sbr.rel (0) target = $region37
    $region36: #{tpu_custom_call.1} parent=1 // pred_region
      %1104 = vsyncadd [#allocation4], 0
      %s1106 = sshll.u32 [#allocation10], 4
      %s1107 = int_to_ptr.vmem [resolvable:$true] %s1106
      %s1108 = sshll.u32 %s4, 4
      %s1109 = int_to_ptr.hbm [resolvable:$true] %s1108
      %1111 = dma.vmem_to_hbm [thread:$0]  %s1107, 128, %s1109, [#allocation4]
    $region37: #{tpu_custom_call.1} parent=1 // pred_fallthru
      _
    // Predicated region
    $region38: #{tpu_custom_call.1} parent=1 // pred_check
      _
    $region39: #{tpu_custom_call.1} parent=1 // pred_check_branch
      %1113 = sbr.rel (0) target = $region41
    $region40: #{tpu_custom_call.1} parent=1 // pred_region
      %1115 = dma.done [#allocation4], 128
    $region41: #{tpu_custom_call.1} parent=1 // pred_fallthru
      _
    %1116 = vsyncpa [#allocation3], 1
    %1117 = vsyncpa [#allocation6], 1
    %1118 = vsyncpa [#allocation9], 1
    %1119 = vsyncpa [#allocation4], 1

</llo_original>
